<compile_context>
chip_gen: v5e
topology: v5e:2x2
jax: 0.10.0
libtpu: 0.0.40
codegen_flags: <defaults>
</compile_context>

<pallas_src>
import jax
import jax.numpy as jnp
import numpy as np
from jax.experimental import pallas as pl
from jax.experimental.pallas import tpu as pltpu

# Small, module-consistent shapes
S, B, E, H, F = 8, 2, 32, 4, 64       # seq, batch, embed_dim, attention_heads, ffn_embed_dim
DH = E // H                           # head dim
N = S * B                             # merged row count (seq-major: row = s*B + b)
HN = H * N
EPS = 1e-5                            # torch.nn.LayerNorm default eps
NEG = -1e8                            # fairseq fp32 key-padding mask value

# weight-slab column layout: (E, 4E + 2F) = (32, 256)
CQKV, CWO, CW1, CW2T = 0, 3 * E, 4 * E, 4 * E + F
# parameter-row lane layout: (1, 4E + F + 4E) = (1, 352)
PBQKV, PBO, PB1, PB2 = 0, 3 * E, 4 * E, 4 * E + F
PLN1G, PLN1B = PB2 + E, PB2 + 2 * E
PLN2G, PLN2B = PB2 + 3 * E, PB2 + 4 * E


def srp_layer_kernel(x_ref, kpad_ref, w_ref, p_ref, out_ref):
    """Fused self-attention + post-norm + FFN + post-norm over all S*B rows at once."""
    x = x_ref[...]                                            # (N, E)
    nt = (((1,), (1,)), ((), ()))                             # contract dim 1 of both (A @ B^T)

    # ---- fused Q|K|V projection (q scale folded into the packed weights/bias) ------
    qkv = jnp.dot(x, w_ref[:, CQKV:CQKV + 3 * E],
                  preferred_element_type=jnp.float32) + p_ref[:, PBQKV:PBQKV + 3 * E]

    # ---- additive attention bias, built in-kernel -----------------------------------
    # Rows are seq-major, so batch id = row % B (N % B == 0 keeps this valid for the
    # head-stacked rows too). 0 where same batch AND key not padded, else -1e8 (exp
    # underflows to exactly 0 in f32, so merging batches is exact).
    rb = jax.lax.broadcasted_iota(jnp.int32, (HN, N), 0) % B
    cb = jax.lax.broadcasted_iota(jnp.int32, (HN, N), 1) % B
    key_ok = kpad_ref[...] < 0.5                              # (1, N) key not padded
    bias = jnp.where((rb == cb) & key_ok, 0.0, NEG)           # (H*N, N)

    # ---- scores for all heads, sublane-stacked; single softmax ----------------------
    scores = []
    for h in range(H):                                        # static unroll, H = 4
        lo = h * DH
        qh = qkv[:, lo:lo + DH]
        kh = qkv[:, E + lo:E + lo + DH]
        scores.append(jax.lax.dot_general(qh, kh, nt,         # no explicit kh.T
                                          preferred_element_type=jnp.float32))
    s = jnp.concatenate(scores, axis=0) + bias                # (H*N, N)
    m = jnp.max(s, axis=-1, keepdims=True)
    p = jnp.exp(s - m)
    p = p * pl.reciprocal(jnp.sum(p, axis=-1, keepdims=True), approx=True)

    # ---- per-head context projected through Wo row-blocks and accumulated -----------
    attn = p_ref[:, PBO:PBO + E]                              # bo, broadcasts over rows
    for h in range(H):
        lo = h * DH
        ctx_h = jnp.dot(p[h * N:(h + 1) * N, :], qkv[:, 2 * E + lo:2 * E + lo + DH],
                        preferred_element_type=jnp.float32)   # (N, DH)
        attn = attn + jnp.dot(ctx_h, w_ref[lo:lo + DH, CWO:CWO + E],
                              preferred_element_type=jnp.float32)

    # dropout (identity in eval) -> residual -> LayerNorm (post-norm)
    h1 = x + attn
    mu = jnp.mean(h1, axis=-1, keepdims=True)
    var = jnp.mean((h1 - mu) ** 2, axis=-1, keepdims=True)
    h1 = (h1 - mu) * jax.lax.rsqrt(var + EPS) * p_ref[:, PLN1G:PLN1G + E] \
        + p_ref[:, PLN1B:PLN1B + E]

    # ---- feed forward: fc1 + ReLU + fc2 (fc2 stored transposed -> NT matmul) --------
    ff = jnp.dot(h1, w_ref[:, CW1:CW1 + F],
                 preferred_element_type=jnp.float32) + p_ref[:, PB1:PB1 + F]
    ff = jnp.maximum(ff, 0.0)                                 # activation_fn = relu
    ff = jax.lax.dot_general(ff, w_ref[:, CW2T:CW2T + F], nt,
                             preferred_element_type=jnp.float32) + p_ref[:, PB2:PB2 + E]

    # dropout (identity) -> residual -> LayerNorm
    h2 = h1 + ff
    mu2 = jnp.mean(h2, axis=-1, keepdims=True)
    var2 = jnp.mean((h2 - mu2) ** 2, axis=-1, keepdims=True)
    out_ref[...] = (h2 - mu2) * jax.lax.rsqrt(var2 + EPS) * p_ref[:, PLN2G:PLN2G + E] \
        + p_ref[:, PLN2B:PLN2B + E]


def pack_params(p):
    """Host-side, one-time packing into two contiguous slabs (q scale folded in)."""
    scale = DH ** -0.5                                        # fairseq MultiheadAttention
    wslab = jnp.concatenate([p["wq"] * scale, p["wk"], p["wv"],   # (E, 3E)
                             p["wo"],                             # (E, E)
                             p["w1"],                             # (E, F)
                             p["w2"].T], axis=1)                  # (E, F)  fc2, transposed
    pslab = jnp.concatenate([p["bq"] * scale, p["bk"], p["bv"],   # (1, 3E)
                             p["bo"], p["b1"], p["b2"],           # (1, E + F + E)
                             p["ln1_g"], p["ln1_b"],
                             p["ln2_g"], p["ln2_b"]], axis=1)     # (1, 4E)
    return wslab, pslab


@jax.jit
def srp_encoder_layer(x_sbe, pad_mask, wslab, pslab):
    """x_sbe: (S, B, E) like the PyTorch module; pad_mask: (B, S) float, 1.0 = padded key."""
    x2d = x_sbe.reshape(N, E)              # seq-major merged rows, no transpose
    key_pad = pad_mask.T.reshape(1, N)     # pad flag per merged key row (tiny (B,S) op)
    vmem = pl.BlockSpec(memory_space=pltpu.MemorySpace.VMEM)
    out2d = pl.pallas_call(
        srp_layer_kernel,
        out_shape=jax.ShapeDtypeStruct((N, E), jnp.float32),
        in_specs=[vmem] * 4,
        out_specs=vmem,
    )(x2d, key_pad, wslab, pslab)
    # TODO(synk): when this layer is stacked L times, fuse the layers into one pallas_call
    # (or prefetch the next layer's slab across calls); at production B*S, move attention
    # to a (query-tile x key-tile) grid with "parallel" dimension_semantics (2 TCs on v7x)
    # and flash-style online softmax instead of the whole-problem single block used here.
    return out2d.reshape(S, B, E)


def reference(x_sbe, pad_mask, p):
    """Plain-JAX mirror of the module's default forward (fairseq post-norm semantics)."""
    x = jnp.transpose(x_sbe, (1, 0, 2))               # (B, S, E)
    q = (x @ p["wq"] + p["bq"]) * (DH ** -0.5)
    k = x @ p["wk"] + p["bk"]
    v = x @ p["wv"] + p["bv"]
    q = q.reshape(B, S, H, DH).transpose(0, 2, 1, 3)
    k = k.reshape(B, S, H, DH).transpose(0, 2, 1, 3)
    v = v.reshape(B, S, H, DH).transpose(0, 2, 1, 3)
    scores = jnp.einsum("bhqd,bhkd->bhqk", q, k) + (pad_mask * NEG)[:, None, None, :]
    attn = jax.nn.softmax(scores, axis=-1)
    ctx = jnp.einsum("bhqk,bhkd->bhqd", attn, v).transpose(0, 2, 1, 3).reshape(B, S, E)
    attn_out = ctx @ p["wo"] + p["bo"]

    def ln(y, g, b):
        mu = jnp.mean(y, axis=-1, keepdims=True)
        var = jnp.mean((y - mu) ** 2, axis=-1, keepdims=True)
        return (y - mu) * jax.lax.rsqrt(var + EPS) * g + b

    h1 = ln(x + attn_out, p["ln1_g"], p["ln1_b"])
    ff = jnp.maximum(h1 @ p["w1"] + p["b1"], 0.0) @ p["w2"] + p["b2"]
    h2 = ln(h1 + ff, p["ln2_g"], p["ln2_b"])
    return jnp.transpose(h2, (1, 0, 2))


def make_params(key):
    ks = jax.random.split(key, 12)
    def w(k, din, dout):
        return jax.random.normal(k, (din, dout), jnp.float32) * 0.05
    def b(k, d):
        return jax.random.normal(k, (1, d), jnp.float32) * 0.01
    return dict(
        wq=w(ks[0], E, E), bq=b(ks[1], E),
        wk=w(ks[2], E, E), bk=b(ks[3], E),
        wv=w(ks[4], E, E), bv=b(ks[5], E),
        wo=w(ks[6], E, E), bo=b(ks[7], E),
        ln1_g=jnp.ones((1, E), jnp.float32), ln1_b=jnp.zeros((1, E), jnp.float32),
        w1=w(ks[8], E, F), b1=b(ks[9], F),
        w2=w(ks[10], F, E), b2=b(ks[11], E),
        ln2_g=jnp.ones((1, E), jnp.float32), ln2_b=jnp.zeros((1, E), jnp.float32),
    )
    # TODO(synk): self_attn_qk_c / self_attn_vo_c / fc_c, weighted LayerNorm and the
    # attn_mask / use_kd branches only matter when compute_c=True / use_kd=True; the
    # default forward path (compute_c=False, use_kd=False, attn_mask=None) is implemented.


if __name__ == "__main__":
    key = jax.random.PRNGKey(0)
    kx, kp = jax.random.split(key)
    params = make_params(kp)
    wslab, pslab = pack_params(params)

    x = jax.random.normal(kx, (S, B, E), jnp.float32)          # (seq_len, batch, embed_dim)
    # encoder_padding_mask: (batch, seq_len), 1.0 where padded
    pad_mask = jnp.zeros((B, S), jnp.float32).at[1, S - 2:].set(1.0)

    out = jax.block_until_ready(srp_encoder_layer(x, pad_mask, wslab, pslab))
    ref = jax.block_until_ready(reference(x, pad_mask, params))
    np.testing.assert_allclose(np.asarray(out), np.asarray(ref), rtol=2e-4, atol=2e-4)

    print("KERNEL_OK")
</pallas_src>

<mosaic_0001>
module attributes {stable_mosaic.version = 11 : i64} {
  func.func @srp_layer_kernel(%arg0: memref<16x32xf32, #tpu.memory_space<vmem>>, %arg1: memref<1x16xf32, #tpu.memory_space<vmem>>, %arg2: memref<32x256xf32, #tpu.memory_space<vmem>>, %arg3: memref<1x352xf32, #tpu.memory_space<vmem>>, %arg4: memref<16x32xf32, #tpu.memory_space<vmem>>) attributes {dimension_semantics = [], scalar_prefetch = 0 : i64, scratch_operands = 0 : i64, tpu.core_type = #tpu.core_type<tc>} {
    %c0 = arith.constant 0 : index
    %c0_0 = arith.constant 0 : index
    %0 = vector.load %arg0[%c0, %c0_0] : memref<16x32xf32, #tpu.memory_space<vmem>>, vector<16x32xf32>
    %c0_1 = arith.constant 0 : index
    %c0_2 = arith.constant 0 : index
    %1 = vector.load %arg2[%c0_1, %c0_2] : memref<32x256xf32, #tpu.memory_space<vmem>>, vector<32x96xf32>
    %cst = arith.constant dense<0.000000e+00> : vector<16x96xf32>
    %2 = tpu.matmul %0, %1, %cst {dimension_numbers = #tpu.dot_dimension_numbers<[1], [0], [0], [1], [0, 0, 1, 1], [], []>} : vector<16x32xf32>, vector<32x96xf32>, vector<16x96xf32> -> vector<16x96xf32>
    %c0_3 = arith.constant 0 : index
    %c0_4 = arith.constant 0 : index
    %3 = vector.load %arg3[%c0_3, %c0_4] : memref<1x352xf32, #tpu.memory_space<vmem>>, vector<1x96xf32>
    %4 = vector.broadcast %3 : vector<1x96xf32> to vector<16x96xf32>
    %5 = arith.addf %2, %4 : vector<16x96xf32>
    %6 = tpu.iota {dimensions = array<i32: 0>} : vector<64x16xi32>
    %c2_i32 = arith.constant 2 : i32
    %c0_i32 = arith.constant 0 : i32
    %7 = arith.cmpi eq, %c2_i32, %c0_i32 : i32
    %c1_i32 = arith.constant 1 : i32
    %8 = arith.select %7, %c1_i32, %c2_i32 : i32
    %9 = vector.broadcast %8 : i32 to vector<64x16xi32>
    %10 = arith.remsi %6, %9 : vector<64x16xi32>
    %c0_i32_5 = arith.constant 0 : i32
    %11 = vector.broadcast %c0_i32_5 : i32 to vector<64x16xi32>
    %12 = arith.cmpi ne, %10, %11 : vector<64x16xi32>
    %c0_i32_6 = arith.constant 0 : i32
    %13 = vector.broadcast %c0_i32_6 : i32 to vector<64x16xi32>
    %14 = arith.cmpi slt, %10, %13 : vector<64x16xi32>
    %c0_i32_7 = arith.constant 0 : i32
    %15 = arith.cmpi slt, %8, %c0_i32_7 : i32
    %16 = vector.broadcast %15 : i1 to vector<64x16xi1>
    %17 = vector.broadcast %16 : vector<64x16xi1> to vector<64x16xi1>
    %18 = arith.xori %14, %17 : vector<64x16xi1>
    %19 = arith.andi %18, %12 : vector<64x16xi1>
    %20 = vector.broadcast %8 : i32 to vector<64x16xi32>
    %21 = arith.addi %10, %20 : vector<64x16xi32>
    %22 = arith.select %19, %21, %10 : vector<64x16xi1>, vector<64x16xi32>
    %23 = tpu.iota {dimensions = array<i32: 1>} : vector<64x16xi32>
    %c2_i32_8 = arith.constant 2 : i32
    %c0_i32_9 = arith.constant 0 : i32
    %24 = arith.cmpi eq, %c2_i32_8, %c0_i32_9 : i32
    %c1_i32_10 = arith.constant 1 : i32
    %25 = arith.select %24, %c1_i32_10, %c2_i32_8 : i32
    %26 = vector.broadcast %25 : i32 to vector<64x16xi32>
    %27 = arith.remsi %23, %26 : vector<64x16xi32>
    %c0_i32_11 = arith.constant 0 : i32
    %28 = vector.broadcast %c0_i32_11 : i32 to vector<64x16xi32>
    %29 = arith.cmpi ne, %27, %28 : vector<64x16xi32>
    %c0_i32_12 = arith.constant 0 : i32
    %30 = vector.broadcast %c0_i32_12 : i32 to vector<64x16xi32>
    %31 = arith.cmpi slt, %27, %30 : vector<64x16xi32>
    %c0_i32_13 = arith.constant 0 : i32
    %32 = arith.cmpi slt, %25, %c0_i32_13 : i32
    %33 = vector.broadcast %32 : i1 to vector<64x16xi1>
    %34 = vector.broadcast %33 : vector<64x16xi1> to vector<64x16xi1>
    %35 = arith.xori %31, %34 : vector<64x16xi1>
    %36 = arith.andi %35, %29 : vector<64x16xi1>
    %37 = vector.broadcast %25 : i32 to vector<64x16xi32>
    %38 = arith.addi %27, %37 : vector<64x16xi32>
    %39 = arith.select %36, %38, %27 : vector<64x16xi1>, vector<64x16xi32>
    %c0_14 = arith.constant 0 : index
    %c0_15 = arith.constant 0 : index
    %40 = vector.load %arg1[%c0_14, %c0_15] : memref<1x16xf32, #tpu.memory_space<vmem>>, vector<1x16xf32>
    %cst_16 = arith.constant 5.000000e-01 : f32
    %41 = vector.broadcast %cst_16 : f32 to vector<1x16xf32>
    %42 = arith.cmpf olt, %40, %41 : vector<1x16xf32>
    %43 = arith.cmpi eq, %22, %39 : vector<64x16xi32>
    %44 = vector.broadcast %42 : vector<1x16xi1> to vector<64x16xi1>
    %45 = arith.andi %43, %44 : vector<64x16xi1>
    %cst_17 = arith.constant 0.000000e+00 : f32
    %cst_18 = arith.constant -1.000000e+08 : f32
    %46 = vector.broadcast %cst_17 : f32 to vector<64x16xf32>
    %47 = vector.broadcast %cst_18 : f32 to vector<64x16xf32>
    %48 = arith.select %45, %46, %47 : vector<64x16xi1>, vector<64x16xf32>
    %49 = vector.extract_strided_slice %5 {offsets = [0, 0], sizes = [16, 8], strides = [1, 1]} : vector<16x96xf32> to vector<16x8xf32>
    %50 = vector.extract_strided_slice %5 {offsets = [0, 32], sizes = [16, 8], strides = [1, 1]} : vector<16x96xf32> to vector<16x8xf32>
    %cst_19 = arith.constant dense<0.000000e+00> : vector<16x16xf32>
    %51 = tpu.matmul %49, %50, %cst_19 {dimension_numbers = #tpu.dot_dimension_numbers<[1], [1], [0], [0], [0, 0, 1, 0], [], []>} : vector<16x8xf32>, vector<16x8xf32>, vector<16x16xf32> -> vector<16x16xf32>
    %52 = vector.extract_strided_slice %5 {offsets = [0, 8], sizes = [16, 8], strides = [1, 1]} : vector<16x96xf32> to vector<16x8xf32>
    %53 = vector.extract_strided_slice %5 {offsets = [0, 40], sizes = [16, 8], strides = [1, 1]} : vector<16x96xf32> to vector<16x8xf32>
    %cst_20 = arith.constant dense<0.000000e+00> : vector<16x16xf32>
    %54 = tpu.matmul %52, %53, %cst_20 {dimension_numbers = #tpu.dot_dimension_numbers<[1], [1], [0], [0], [0, 0, 1, 0], [], []>} : vector<16x8xf32>, vector<16x8xf32>, vector<16x16xf32> -> vector<16x16xf32>
    %55 = vector.extract_strided_slice %5 {offsets = [0, 16], sizes = [16, 8], strides = [1, 1]} : vector<16x96xf32> to vector<16x8xf32>
    %56 = vector.extract_strided_slice %5 {offsets = [0, 48], sizes = [16, 8], strides = [1, 1]} : vector<16x96xf32> to vector<16x8xf32>
    %cst_21 = arith.constant dense<0.000000e+00> : vector<16x16xf32>
    %57 = tpu.matmul %55, %56, %cst_21 {dimension_numbers = #tpu.dot_dimension_numbers<[1], [1], [0], [0], [0, 0, 1, 0], [], []>} : vector<16x8xf32>, vector<16x8xf32>, vector<16x16xf32> -> vector<16x16xf32>
    %58 = vector.extract_strided_slice %5 {offsets = [0, 24], sizes = [16, 8], strides = [1, 1]} : vector<16x96xf32> to vector<16x8xf32>
    %59 = vector.extract_strided_slice %5 {offsets = [0, 56], sizes = [16, 8], strides = [1, 1]} : vector<16x96xf32> to vector<16x8xf32>
    %cst_22 = arith.constant dense<0.000000e+00> : vector<16x16xf32>
    %60 = tpu.matmul %58, %59, %cst_22 {dimension_numbers = #tpu.dot_dimension_numbers<[1], [1], [0], [0], [0, 0, 1, 0], [], []>} : vector<16x8xf32>, vector<16x8xf32>, vector<16x16xf32> -> vector<16x16xf32>
    %61 = tpu.concatenate %51, %54, %57, %60 in 0 : vector<16x16xf32>, vector<16x16xf32>, vector<16x16xf32>, vector<16x16xf32> -> vector<64x16xf32>
    %62 = arith.addf %61, %48 : vector<64x16xf32>
    %cst_23 = arith.constant dense<0xFF800000> : vector<64xf32>
    %63 = vector.multi_reduction <maximumf>, %62, %cst_23 [1] : vector<64x16xf32> to vector<64xf32>
    %64 = vector.shape_cast %63 : vector<64xf32> to vector<64x1xf32>
    %65 = vector.broadcast %64 : vector<64x1xf32> to vector<64x16xf32>
    %66 = arith.subf %62, %65 : vector<64x16xf32>
    %67 = math.exp %66 : vector<64x16xf32>
    %cst_24 = arith.constant dense<0.000000e+00> : vector<64xf32>
    %68 = vector.multi_reduction <add>, %67, %cst_24 [1] : vector<64x16xf32> to vector<64xf32>
    %69 = vector.shape_cast %68 : vector<64xf32> to vector<64x1xf32>
    %70 = tpu.reciprocal %69 {approx = true} : vector<64x1xf32> -> vector<64x1xf32>
    %71 = vector.broadcast %70 : vector<64x1xf32> to vector<64x16xf32>
    %72 = arith.mulf %67, %71 : vector<64x16xf32>
    %c0_25 = arith.constant 0 : index
    %c96 = arith.constant 96 : index
    %73 = vector.load %arg3[%c0_25, %c96] : memref<1x352xf32, #tpu.memory_space<vmem>>, vector<1x32xf32>
    %74 = vector.extract_strided_slice %72 {offsets = [0, 0], sizes = [16, 16], strides = [1, 1]} : vector<64x16xf32> to vector<16x16xf32>
    %75 = vector.extract_strided_slice %5 {offsets = [0, 64], sizes = [16, 8], strides = [1, 1]} : vector<16x96xf32> to vector<16x8xf32>
    %cst_26 = arith.constant dense<0.000000e+00> : vector<16x8xf32>
    %76 = tpu.matmul %74, %75, %cst_26 {dimension_numbers = #tpu.dot_dimension_numbers<[1], [0], [0], [1], [0, 0, 1, 1], [], []>} : vector<16x16xf32>, vector<16x8xf32>, vector<16x8xf32> -> vector<16x8xf32>
    %c0_27 = arith.constant 0 : index
    %c96_28 = arith.constant 96 : index
    %77 = vector.load %arg2[%c0_27, %c96_28] : memref<32x256xf32, #tpu.memory_space<vmem>>, vector<8x32xf32>
    %cst_29 = arith.constant dense<0.000000e+00> : vector<16x32xf32>
    %78 = tpu.matmul %76, %77, %cst_29 {dimension_numbers = #tpu.dot_dimension_numbers<[1], [0], [0], [1], [0, 0, 1, 1], [], []>} : vector<16x8xf32>, vector<8x32xf32>, vector<16x32xf32> -> vector<16x32xf32>
    %79 = vector.broadcast %73 : vector<1x32xf32> to vector<16x32xf32>
    %80 = arith.addf %79, %78 : vector<16x32xf32>
    %81 = vector.extract_strided_slice %72 {offsets = [16, 0], sizes = [16, 16], strides = [1, 1]} : vector<64x16xf32> to vector<16x16xf32>
    %82 = vector.extract_strided_slice %5 {offsets = [0, 72], sizes = [16, 8], strides = [1, 1]} : vector<16x96xf32> to vector<16x8xf32>
    %cst_30 = arith.constant dense<0.000000e+00> : vector<16x8xf32>
    %83 = tpu.matmul %81, %82, %cst_30 {dimension_numbers = #tpu.dot_dimension_numbers<[1], [0], [0], [1], [0, 0, 1, 1], [], []>} : vector<16x16xf32>, vector<16x8xf32>, vector<16x8xf32> -> vector<16x8xf32>
    %c8 = arith.constant 8 : index
    %c96_31 = arith.constant 96 : index
    %84 = vector.load %arg2[%c8, %c96_31] : memref<32x256xf32, #tpu.memory_space<vmem>>, vector<8x32xf32>
    %cst_32 = arith.constant dense<0.000000e+00> : vector<16x32xf32>
    %85 = tpu.matmul %83, %84, %cst_32 {dimension_numbers = #tpu.dot_dimension_numbers<[1], [0], [0], [1], [0, 0, 1, 1], [], []>} : vector<16x8xf32>, vector<8x32xf32>, vector<16x32xf32> -> vector<16x32xf32>
    %86 = arith.addf %80, %85 : vector<16x32xf32>
    %87 = vector.extract_strided_slice %72 {offsets = [32, 0], sizes = [16, 16], strides = [1, 1]} : vector<64x16xf32> to vector<16x16xf32>
    %88 = vector.extract_strided_slice %5 {offsets = [0, 80], sizes = [16, 8], strides = [1, 1]} : vector<16x96xf32> to vector<16x8xf32>
    %cst_33 = arith.constant dense<0.000000e+00> : vector<16x8xf32>
    %89 = tpu.matmul %87, %88, %cst_33 {dimension_numbers = #tpu.dot_dimension_numbers<[1], [0], [0], [1], [0, 0, 1, 1], [], []>} : vector<16x16xf32>, vector<16x8xf32>, vector<16x8xf32> -> vector<16x8xf32>
    %c16 = arith.constant 16 : index
    %c96_34 = arith.constant 96 : index
    %90 = vector.load %arg2[%c16, %c96_34] : memref<32x256xf32, #tpu.memory_space<vmem>>, vector<8x32xf32>
    %cst_35 = arith.constant dense<0.000000e+00> : vector<16x32xf32>
    %91 = tpu.matmul %89, %90, %cst_35 {dimension_numbers = #tpu.dot_dimension_numbers<[1], [0], [0], [1], [0, 0, 1, 1], [], []>} : vector<16x8xf32>, vector<8x32xf32>, vector<16x32xf32> -> vector<16x32xf32>
    %92 = arith.addf %86, %91 : vector<16x32xf32>
    %93 = vector.extract_strided_slice %72 {offsets = [48, 0], sizes = [16, 16], strides = [1, 1]} : vector<64x16xf32> to vector<16x16xf32>
    %94 = vector.extract_strided_slice %5 {offsets = [0, 88], sizes = [16, 8], strides = [1, 1]} : vector<16x96xf32> to vector<16x8xf32>
    %cst_36 = arith.constant dense<0.000000e+00> : vector<16x8xf32>
    %95 = tpu.matmul %93, %94, %cst_36 {dimension_numbers = #tpu.dot_dimension_numbers<[1], [0], [0], [1], [0, 0, 1, 1], [], []>} : vector<16x16xf32>, vector<16x8xf32>, vector<16x8xf32> -> vector<16x8xf32>
    %c24 = arith.constant 24 : index
    %c96_37 = arith.constant 96 : index
    %96 = vector.load %arg2[%c24, %c96_37] : memref<32x256xf32, #tpu.memory_space<vmem>>, vector<8x32xf32>
    %cst_38 = arith.constant dense<0.000000e+00> : vector<16x32xf32>
    %97 = tpu.matmul %95, %96, %cst_38 {dimension_numbers = #tpu.dot_dimension_numbers<[1], [0], [0], [1], [0, 0, 1, 1], [], []>} : vector<16x8xf32>, vector<8x32xf32>, vector<16x32xf32> -> vector<16x32xf32>
    %98 = arith.addf %92, %97 : vector<16x32xf32>
    %99 = arith.addf %0, %98 : vector<16x32xf32>
    %cst_39 = arith.constant dense<0.000000e+00> : vector<16xf32>
    %100 = vector.multi_reduction <add>, %99, %cst_39 [1] : vector<16x32xf32> to vector<16xf32>
    %101 = vector.shape_cast %100 : vector<16xf32> to vector<16x1xf32>
    %cst_40 = arith.constant 3.200000e+01 : f32
    %102 = vector.broadcast %cst_40 : f32 to vector<16x1xf32>
    %103 = arith.divf %101, %102 : vector<16x1xf32>
    %104 = vector.broadcast %103 : vector<16x1xf32> to vector<16x32xf32>
    %105 = arith.subf %99, %104 : vector<16x32xf32>
    %106 = arith.mulf %105, %105 : vector<16x32xf32>
    %cst_41 = arith.constant dense<0.000000e+00> : vector<16xf32>
    %107 = vector.multi_reduction <add>, %106, %cst_41 [1] : vector<16x32xf32> to vector<16xf32>
    %108 = vector.shape_cast %107 : vector<16xf32> to vector<16x1xf32>
    %cst_42 = arith.constant 3.200000e+01 : f32
    %109 = vector.broadcast %cst_42 : f32 to vector<16x1xf32>
    %110 = arith.divf %108, %109 : vector<16x1xf32>
    %111 = vector.broadcast %103 : vector<16x1xf32> to vector<16x32xf32>
    %112 = arith.subf %99, %111 : vector<16x32xf32>
    %cst_43 = arith.constant 9.99999974E-6 : f32
    %113 = vector.broadcast %cst_43 : f32 to vector<16x1xf32>
    %114 = arith.addf %110, %113 : vector<16x1xf32>
    %115 = math.rsqrt %114 : vector<16x1xf32>
    %116 = vector.broadcast %115 : vector<16x1xf32> to vector<16x32xf32>
    %117 = arith.mulf %112, %116 : vector<16x32xf32>
    %c0_44 = arith.constant 0 : index
    %c224 = arith.constant 224 : index
    %118 = vector.load %arg3[%c0_44, %c224] : memref<1x352xf32, #tpu.memory_space<vmem>>, vector<1x32xf32>
    %119 = vector.broadcast %118 : vector<1x32xf32> to vector<16x32xf32>
    %120 = arith.mulf %117, %119 : vector<16x32xf32>
    %c0_45 = arith.constant 0 : index
    %c256 = arith.constant 256 : index
    %121 = vector.load %arg3[%c0_45, %c256] : memref<1x352xf32, #tpu.memory_space<vmem>>, vector<1x32xf32>
    %122 = vector.broadcast %121 : vector<1x32xf32> to vector<16x32xf32>
    %123 = arith.addf %120, %122 : vector<16x32xf32>
    %c0_46 = arith.constant 0 : index
    %c128 = arith.constant 128 : index
    %124 = vector.load %arg2[%c0_46, %c128] : memref<32x256xf32, #tpu.memory_space<vmem>>, vector<32x64xf32>
    %cst_47 = arith.constant dense<0.000000e+00> : vector<16x64xf32>
    %125 = tpu.matmul %123, %124, %cst_47 {dimension_numbers = #tpu.dot_dimension_numbers<[1], [0], [0], [1], [0, 0, 1, 1], [], []>} : vector<16x32xf32>, vector<32x64xf32>, vector<16x64xf32> -> vector<16x64xf32>
    %c0_48 = arith.constant 0 : index
    %c128_49 = arith.constant 128 : index
    %126 = vector.load %arg3[%c0_48, %c128_49] : memref<1x352xf32, #tpu.memory_space<vmem>>, vector<1x64xf32>
    %127 = vector.broadcast %126 : vector<1x64xf32> to vector<16x64xf32>
    %128 = arith.addf %125, %127 : vector<16x64xf32>
    %cst_50 = arith.constant 0.000000e+00 : f32
    %129 = vector.broadcast %cst_50 : f32 to vector<16x64xf32>
    %130 = arith.maximumf %128, %129 : vector<16x64xf32>
    %c0_51 = arith.constant 0 : index
    %c192 = arith.constant 192 : index
    %131 = vector.load %arg2[%c0_51, %c192] : memref<32x256xf32, #tpu.memory_space<vmem>>, vector<32x64xf32>
    %cst_52 = arith.constant dense<0.000000e+00> : vector<16x32xf32>
    %132 = tpu.matmul %130, %131, %cst_52 {dimension_numbers = #tpu.dot_dimension_numbers<[1], [1], [0], [0], [0, 0, 1, 0], [], []>} : vector<16x64xf32>, vector<32x64xf32>, vector<16x32xf32> -> vector<16x32xf32>
    %c0_53 = arith.constant 0 : index
    %c192_54 = arith.constant 192 : index
    %133 = vector.load %arg3[%c0_53, %c192_54] : memref<1x352xf32, #tpu.memory_space<vmem>>, vector<1x32xf32>
    %134 = vector.broadcast %133 : vector<1x32xf32> to vector<16x32xf32>
    %135 = arith.addf %132, %134 : vector<16x32xf32>
    %136 = arith.addf %123, %135 : vector<16x32xf32>
    %cst_55 = arith.constant dense<0.000000e+00> : vector<16xf32>
    %137 = vector.multi_reduction <add>, %136, %cst_55 [1] : vector<16x32xf32> to vector<16xf32>
    %138 = vector.shape_cast %137 : vector<16xf32> to vector<16x1xf32>
    %cst_56 = arith.constant 3.200000e+01 : f32
    %139 = vector.broadcast %cst_56 : f32 to vector<16x1xf32>
    %140 = arith.divf %138, %139 : vector<16x1xf32>
    %141 = vector.broadcast %140 : vector<16x1xf32> to vector<16x32xf32>
    %142 = arith.subf %136, %141 : vector<16x32xf32>
    %143 = arith.mulf %142, %142 : vector<16x32xf32>
    %cst_57 = arith.constant dense<0.000000e+00> : vector<16xf32>
    %144 = vector.multi_reduction <add>, %143, %cst_57 [1] : vector<16x32xf32> to vector<16xf32>
    %145 = vector.shape_cast %144 : vector<16xf32> to vector<16x1xf32>
    %cst_58 = arith.constant 3.200000e+01 : f32
    %146 = vector.broadcast %cst_58 : f32 to vector<16x1xf32>
    %147 = arith.divf %145, %146 : vector<16x1xf32>
    %148 = vector.broadcast %140 : vector<16x1xf32> to vector<16x32xf32>
    %149 = arith.subf %136, %148 : vector<16x32xf32>
    %cst_59 = arith.constant 9.99999974E-6 : f32
    %150 = vector.broadcast %cst_59 : f32 to vector<16x1xf32>
    %151 = arith.addf %147, %150 : vector<16x1xf32>
    %152 = math.rsqrt %151 : vector<16x1xf32>
    %153 = vector.broadcast %152 : vector<16x1xf32> to vector<16x32xf32>
    %154 = arith.mulf %149, %153 : vector<16x32xf32>
    %c0_60 = arith.constant 0 : index
    %c288 = arith.constant 288 : index
    %155 = vector.load %arg3[%c0_60, %c288] : memref<1x352xf32, #tpu.memory_space<vmem>>, vector<1x32xf32>
    %156 = vector.broadcast %155 : vector<1x32xf32> to vector<16x32xf32>
    %157 = arith.mulf %154, %156 : vector<16x32xf32>
    %c0_61 = arith.constant 0 : index
    %c320 = arith.constant 320 : index
    %158 = vector.load %arg3[%c0_61, %c320] : memref<1x352xf32, #tpu.memory_space<vmem>>, vector<1x32xf32>
    %159 = vector.broadcast %158 : vector<1x32xf32> to vector<16x32xf32>
    %160 = arith.addf %157, %159 : vector<16x32xf32>
    %c0_62 = arith.constant 0 : index
    %c0_63 = arith.constant 0 : index
    %161 = vector.load %arg4[%c0_62, %c0_63] : memref<16x32xf32, #tpu.memory_space<vmem>>, vector<16x32xf32>
    tpu.vector_store %arg4[%c0_62, %c0_63], %160 {strides = array<i32>} : memref<16x32xf32, #tpu.memory_space<vmem>>, vector<16x32xf32>,
    return
  }
}

</mosaic_0001>

<llo_original>
// kernel: srp_encoder_layer.1
$region0: #{srp_encoder_layer.1}
  #allocation0 [shape = 'u32[]', space=smem, size = 0x4, offset = 0x4, fixed_abs, tag = 'smem constant byte address 0x4 - core index']
  #allocation1 [shape = 'u32[72,128]{1,0:T(1,128)}', space=vmem, size = 0x9000, scoped, tag = 'internal scratch']
  %s0 = inlined_call_operand.vmem [shape: f32[16,32], index: 0, kind: input, shape index: {}]
  %s1 = inlined_call_operand.vmem [shape: f32[1,16], index: 1, kind: input, shape index: {}]
  %s2 = inlined_call_operand.hbm [shape: f32[32,256], index: 2, kind: input, shape index: {}]
  %s3 = inlined_call_operand.vmem [shape: f32[1,352], index: 3, kind: input, shape index: {}]
  %s4 = inlined_call_operand.hbm [shape: f32[16,32], index: 4, kind: output, shape index: {}]
  %s5 = sld [smem:[#allocation0]]
  $region30: #{srp_encoder_layer.1} parent=0
    _
  %s7 = ssub.s32 1, %s5
  %s8 = scalar_select 0, %s7, %s5
  $region1: #{srp_encoder_layer.1} parent=0
    #allocation2 [shape = 'u8[32768]{0}', space=vmem, size = 0x8000, scoped, tag = 'input window, operand 2, single buffered']
    #allocation3 [shape = 's32[1]{0}', space=sflag, size = 0x4, scoped, tag = 'scoped memory for srp_encoder_layer.1']
    #allocation4 [shape = 's32[1]{0}', space=sflag, size = 0x4, scoped, tag = 'scoped memory for srp_encoder_layer.1']
    #allocation5 [shape = 'u8[8192]{0}', space=vmem, size = 0x2000, scoped, tag = 'output window, operand 0, single buffered']
    %9 = vsyncpa [#allocation3], 0
    %10 = vsyncpa [#allocation4], 0
    // Predicated region
    $region2: #{srp_encoder_layer.1} parent=1 // pred_check
      _
    $region3: #{srp_encoder_layer.1} parent=1 // pred_check_branch
      %12 = sbr.rel (0) target = $region5
    $region4: #{srp_encoder_layer.1} parent=1 // pred_region
      _
    $region5: #{srp_encoder_layer.1} parent=1 // pred_fallthru
      _
    // Predicated region
    $region6: #{srp_encoder_layer.1} parent=1 // pred_check
      _
    $region7: #{srp_encoder_layer.1} parent=1 // pred_check_branch
      %14 = sbr.rel (0) target = $region9
    $region8: #{srp_encoder_layer.1} parent=1 // pred_region
      _
    $region9: #{srp_encoder_layer.1} parent=1 // pred_fallthru
      _
    // Predicated region
    $region10: #{srp_encoder_layer.1} parent=1 // pred_check
      _
    $region11: #{srp_encoder_layer.1} parent=1 // pred_check_branch
      %16 = sbr.rel (0) target = $region13
    $region12: #{srp_encoder_layer.1} parent=1 // pred_region
      %18 = vsyncadd [#allocation3], 0
      %s19 = sshll.u32 %s2, 4
      %s20 = int_to_ptr.hbm [resolvable:$true] %s19
      %s21 = sshll.u32 [#allocation2], 4
      %s22 = int_to_ptr.vmem [resolvable:$true] %s21
      %27 = dma.hbm_to_vmem [thread:$0]  %s20, 1024, %s22, [#allocation3], 256, 256, 16
    $region13: #{srp_encoder_layer.1} parent=1 // pred_fallthru
      _
    // Predicated region
    $region14: #{srp_encoder_layer.1} parent=1 // pred_check
      _
    $region15: #{srp_encoder_layer.1} parent=1 // pred_check_branch
      %29 = sbr.rel (0) target = $region17
    $region16: #{srp_encoder_layer.1} parent=1 // pred_region
      _
    $region17: #{srp_encoder_layer.1} parent=1 // pred_fallthru
      _
    // Predicated region
    $region18: #{srp_encoder_layer.1} parent=1 // pred_check
      _
    $region19: #{srp_encoder_layer.1} parent=1 // pred_check_branch
      %31 = sbr.rel (0) target = $region21
    $region20: #{srp_encoder_layer.1} parent=1 // pred_region
      %33 = dma.done [#allocation3], 1024
    $region21: #{srp_encoder_layer.1} parent=1 // pred_fallthru
      _
    %v34 = vld [vmem:[%s0] sm:$0xff]
    %v35 = vld [vmem:[%s0 + $0x8] sm:$0xff]
    %v36 = vld [vmem:[#allocation2] sm:$0xff]
    %v37 = vld [vmem:[#allocation2 + $0x10] sm:$0xff]
    %v38 = vld [vmem:[#allocation2 + $0x20] sm:$0xff]
    %v39 = vld [vmem:[#allocation2 + $0x30] sm:$0xff]
    %v40 = vld [vmem:[%s3] sm:$0x1]
    %v42 = vperm.slane %v40, 0
    %vm44 = vcmask 261120
    %v46 = vsel %vm44, %v34, 0
    %v49 = vsel %vm44, %v35, 0
    %51 = vmatpush.msra.mxu0 0.0
    %52 = vmatpush.msra.mxu0 0.0
    %53 = vmatpush.msra.mxu0 0.0
    %54 = vmatpush.msra.mxu0 0.0
    %55 = vmatpush.msra.mxu0 0.0
    %56 = vmatpush.msra.mxu0 0.0
    %57 = vmatpush.msra.mxu0 0.0
    %58 = vmatpush.msra.mxu0 0.0
    %59 = vmatpush.msra.mxu0 0.0
    %60 = vmatpush.msra.mxu0 0.0
    %61 = vmatpush.msra.mxu0 0.0
    %62 = vmatpush.msra.mxu0 0.0
    %63 = vmatpush.msra.mxu0 %v39
    %64 = vmatpush.msra.mxu0 %v38
    %65 = vmatpush.msra.mxu0 %v37
    %66 = vmatpush.msra.mxu0 %v36
    %67 = vmatmul.f32.gmra.mxu0 %v46
    %v68 = vpop.f32.mrf.mxu0
    %v69 = vadd.f32 %v42, %v68
    %70 = vmatmul.f32.gmra.mxu0 %v49
    %v71 = vpop.f32.mrf.mxu0
    %v72 = vadd.f32 %v42, %v71
    %73 = vdwg.mxu0
    %v74 = vlaneseq
    %v75 = vshrl.u32 %v74, 7
    %v76 = vadd.s32 %v75, 8
    %v77 = vadd.s32 %v75, 16
    %v78 = vadd.s32 %v75, 24
    %v79 = vadd.s32 %v75, 32
    %v80 = vadd.s32 %v75, 40
    %v81 = vadd.s32 %v75, 48
    %v82 = vadd.s32 %v75, 56
    %vm83 = vcmp.lt.s32.totalorder %v75, 0
    %v84 = vsub.s32 0, %v75
    %v85 = vsel %vm83, %v84, %v75
    %v86 = vshrl.u32 %v85, 1
    %v87 = vand.u32 %v85, 1
    %v88 = vsub.s32 0, %v87
    %v89 = vsel %vm83, %v88, %v87
    %vm90 = vcmp.lt.s32.totalorder %v76, 0
    %v91 = vsub.s32 0, %v76
    %v92 = vsel %vm90, %v91, %v76
    %v93 = vshrl.u32 %v92, 1
    %v94 = vand.u32 %v92, 1
    %v95 = vsub.s32 0, %v94
    %v96 = vsel %vm90, %v95, %v94
    %vm97 = vcmp.lt.s32.totalorder %v77, 0
    %v98 = vsub.s32 0, %v77
    %v99 = vsel %vm97, %v98, %v77
    %v100 = vshrl.u32 %v99, 1
    %v101 = vand.u32 %v99, 1
    %v102 = vsub.s32 0, %v101
    %v103 = vsel %vm97, %v102, %v101
    %vm104 = vcmp.lt.s32.totalorder %v78, 0
    %v105 = vsub.s32 0, %v78
    %v106 = vsel %vm104, %v105, %v78
    %v107 = vshrl.u32 %v106, 1
    %v108 = vand.u32 %v106, 1
    %v109 = vsub.s32 0, %v108
    %v110 = vsel %vm104, %v109, %v108
    %vm111 = vcmp.lt.s32.totalorder %v79, 0
    %v112 = vsub.s32 0, %v79
    %v113 = vsel %vm111, %v112, %v79
    %v114 = vshrl.u32 %v113, 1
    %v115 = vand.u32 %v113, 1
    %v116 = vsub.s32 0, %v115
    %v117 = vsel %vm111, %v116, %v115
    %vm118 = vcmp.lt.s32.totalorder %v80, 0
    %v119 = vsub.s32 0, %v80
    %v120 = vsel %vm118, %v119, %v80
    %v121 = vshrl.u32 %v120, 1
    %v122 = vand.u32 %v120, 1
    %v123 = vsub.s32 0, %v122
    %v124 = vsel %vm118, %v123, %v122
    %vm125 = vcmp.lt.s32.totalorder %v81, 0
    %v126 = vsub.s32 0, %v81
    %v127 = vsel %vm125, %v126, %v81
    %v128 = vshrl.u32 %v127, 1
    %v129 = vand.u32 %v127, 1
    %v130 = vsub.s32 0, %v129
    %v131 = vsel %vm125, %v130, %v129
    %vm132 = vcmp.lt.s32.totalorder %v82, 0
    %v133 = vsub.s32 0, %v82
    %v134 = vsel %vm132, %v133, %v82
    %v135 = vshrl.u32 %v134, 1
    %v136 = vand.u32 %v134, 1
    %v137 = vsub.s32 0, %v136
    %v138 = vsel %vm132, %v137, %v136
    %vm139 = vcmp.ne.s32.totalorder %v89, 0
    %vm140 = vcmp.ne.s32.totalorder %v96, 0
    %vm141 = vcmp.ne.s32.totalorder %v103, 0
    %vm142 = vcmp.ne.s32.totalorder %v110, 0
    %vm143 = vcmp.ne.s32.totalorder %v117, 0
    %vm144 = vcmp.ne.s32.totalorder %v124, 0
    %vm145 = vcmp.ne.s32.totalorder %v131, 0
    %vm146 = vcmp.ne.s32.totalorder %v138, 0
    %vm147 = vcmp.lt.s32.totalorder %v89, 0
    %vm148 = vcmp.lt.s32.totalorder %v96, 0
    %vm149 = vcmp.lt.s32.totalorder %v103, 0
    %vm150 = vcmp.lt.s32.totalorder %v110, 0
    %vm151 = vcmp.lt.s32.totalorder %v117, 0
    %vm152 = vcmp.lt.s32.totalorder %v124, 0
    %vm153 = vcmp.lt.s32.totalorder %v131, 0
    %vm154 = vcmp.lt.s32.totalorder %v138, 0
    %vm155 = vmand %vm147, %vm139
    %vm156 = vmand %vm148, %vm140
    %vm157 = vmand %vm149, %vm141
    %vm158 = vmand %vm150, %vm142
    %vm159 = vmand %vm151, %vm143
    %vm160 = vmand %vm152, %vm144
    %vm161 = vmand %vm153, %vm145
    %vm162 = vmand %vm154, %vm146
    %v163 = vadd.s32 %v89, 2
    %v164 = vadd.s32 %v96, 2
    %v165 = vadd.s32 %v103, 2
    %v166 = vadd.s32 %v110, 2
    %v167 = vadd.s32 %v117, 2
    %v168 = vadd.s32 %v124, 2
    %v169 = vadd.s32 %v131, 2
    %v170 = vadd.s32 %v138, 2
    %v171 = vsel %vm155, %v163, %v89
    %v172 = vsel %vm156, %v164, %v96
    %v173 = vsel %vm157, %v165, %v103
    %v174 = vsel %vm158, %v166, %v110
    %v175 = vsel %vm159, %v167, %v117
    %v176 = vsel %vm160, %v168, %v124
    %v177 = vsel %vm161, %v169, %v131
    %v178 = vsel %vm162, %v170, %v138
    %v179 = vlaneseq
    %v180 = vand.u32 %v179, 127
    %vm181 = vcmp.lt.s32.totalorder %v180, 0
    %v182 = vsub.s32 0, %v180
    %v183 = vsel %vm181, %v182, %v180
    %v184 = vshrl.u32 %v183, 1
    %v185 = vand.u32 %v183, 1
    %v186 = vsub.s32 0, %v185
    %v187 = vsel %vm181, %v186, %v185
    %vm188 = vcmp.ne.s32.totalorder %v187, 0
    %vm189 = vcmp.lt.s32.totalorder %v187, 0
    %vm190 = vmand %vm189, %vm188
    %v191 = vadd.s32 %v187, 2
    %v192 = vsel %vm190, %v191, %v187
    %v193 = vld [vmem:[%s1] sm:$0x1]
    %vm194 = vcmp.lt.f32.partialorder %v193, 0.5
    %vm195 = vcmp.eq.s32.totalorder %v171, %v192
    %vm196 = vcmp.eq.s32.totalorder %v172, %v192
    %vm197 = vcmp.eq.s32.totalorder %v173, %v192
    %vm198 = vcmp.eq.s32.totalorder %v174, %v192
    %vm199 = vcmp.eq.s32.totalorder %v175, %v192
    %vm200 = vcmp.eq.s32.totalorder %v176, %v192
    %vm201 = vcmp.eq.s32.totalorder %v177, %v192
    %vm202 = vcmp.eq.s32.totalorder %v178, %v192
    %v203 = vsel %vm194, 1, 0
    %v204 = vperm.slane %v203, 0
    %vm205 = vcmp.eq.s32.totalorder %v204, 1
    %vm206 = vmand %vm195, %vm205
    %vm207 = vmand %vm196, %vm205
    %vm208 = vmand %vm197, %vm205
    %vm209 = vmand %vm198, %vm205
    %vm210 = vmand %vm199, %vm205
    %vm211 = vmand %vm200, %vm205
    %vm212 = vmand %vm201, %vm205
    %vm213 = vmand %vm202, %vm205
    %v214 = vsel %vm206, 0.0, -1e+08
    %v215 = vsel %vm207, 0.0, -1e+08
    %v216 = vsel %vm208, 0.0, -1e+08
    %v217 = vsel %vm209, 0.0, -1e+08
    %v218 = vsel %vm210, 0.0, -1e+08
    %v219 = vsel %vm211, 0.0, -1e+08
    %v220 = vsel %vm212, 0.0, -1e+08
    %v221 = vsel %vm213, 0.0, -1e+08
    %224 = vrot.lane.b32.xlu0 %v69, 96
    %v225 = vpop.permute.xlu0 %224
    %226 = vrot.lane.b32.xlu0 %v72, 96
    %v227 = vpop.permute.xlu0 %226
    %vm228 = vcmask 64512
    %v229 = vsel %vm228, %v69, 0
    %v231 = vsel %vm228, %v72, 0
    %v233 = vsel %vm228, %v225, 0
    %v235 = vsel %vm228, %v227, 0
    %237 = vmatpush.xpose.msra.mxu0 0.0
    %238 = vmatpush.xpose.msra.mxu0 0.0
    %239 = vmatpush.xpose.msra.mxu0 0.0
    %240 = vmatpush.xpose.msra.mxu0 0.0
    %241 = vmatpush.xpose.msra.mxu0 0.0
    %242 = vmatpush.xpose.msra.mxu0 0.0
    %243 = vmatpush.xpose.msra.mxu0 0.0
    %244 = vmatpush.xpose.msra.mxu0 0.0
    %245 = vmatpush.xpose.msra.mxu0 0.0
    %246 = vmatpush.xpose.msra.mxu0 0.0
    %247 = vmatpush.xpose.msra.mxu0 0.0
    %248 = vmatpush.xpose.msra.mxu0 0.0
    %249 = vmatpush.xpose.msra.mxu0 0.0
    %250 = vmatpush.xpose.msra.mxu0 0.0
    %251 = vmatpush.xpose.msra.mxu0 %v235
    %252 = vmatpush.xpose.msra.mxu0 %v233
    %253 = vmatmul.f32.gmra.mxu0 %v229
    %v254 = vpop.f32.mrf.mxu0
    %v255 = vadd.f32 0.0, %v254
    %256 = vmatmul.f32.gmra.mxu0 %v231
    %v257 = vpop.f32.mrf.mxu0
    %v258 = vadd.f32 0.0, %v257
    %259 = vdwg.mxu0
    %260 = vrot.lane.b32.xlu0 %v69, 120
    %v261 = vpop.permute.xlu0 %260
    %262 = vrot.lane.b32.xlu0 %v72, 120
    %v263 = vpop.permute.xlu0 %262
    %264 = vrot.lane.b32.xlu0 %v69, 88
    %v265 = vpop.permute.xlu0 %264
    %266 = vrot.lane.b32.xlu0 %v72, 88
    %v267 = vpop.permute.xlu0 %266
    %v268 = vsel %vm228, %v261, 0
    %v270 = vsel %vm228, %v263, 0
    %v272 = vsel %vm228, %v265, 0
    %v274 = vsel %vm228, %v267, 0
    %276 = vmatpush.xpose.msra.mxu0 0.0
    %277 = vmatpush.xpose.msra.mxu0 0.0
    %278 = vmatpush.xpose.msra.mxu0 0.0
    %279 = vmatpush.xpose.msra.mxu0 0.0
    %280 = vmatpush.xpose.msra.mxu0 0.0
    %281 = vmatpush.xpose.msra.mxu0 0.0
    %282 = vmatpush.xpose.msra.mxu0 0.0
    %283 = vmatpush.xpose.msra.mxu0 0.0
    %284 = vmatpush.xpose.msra.mxu0 0.0
    %285 = vmatpush.xpose.msra.mxu0 0.0
    %286 = vmatpush.xpose.msra.mxu0 0.0
    %287 = vmatpush.xpose.msra.mxu0 0.0
    %288 = vmatpush.xpose.msra.mxu0 0.0
    %289 = vmatpush.xpose.msra.mxu0 0.0
    %290 = vmatpush.xpose.msra.mxu0 %v274
    %291 = vmatpush.xpose.msra.mxu0 %v272
    %292 = vmatmul.f32.gmra.mxu0 %v268
    %v293 = vpop.f32.mrf.mxu0
    %v294 = vadd.f32 0.0, %v293
    %295 = vmatmul.f32.gmra.mxu0 %v270
    %v296 = vpop.f32.mrf.mxu0
    %v297 = vadd.f32 0.0, %v296
    %298 = vdwg.mxu0
    %299 = vrot.lane.b32.xlu0 %v69, 112
    %v300 = vpop.permute.xlu0 %299
    %301 = vrot.lane.b32.xlu0 %v72, 112
    %v302 = vpop.permute.xlu0 %301
    %303 = vrot.lane.b32.xlu0 %v69, 80
    %v304 = vpop.permute.xlu0 %303
    %305 = vrot.lane.b32.xlu0 %v72, 80
    %v306 = vpop.permute.xlu0 %305
    %v307 = vsel %vm228, %v300, 0
    %v309 = vsel %vm228, %v302, 0
    %v311 = vsel %vm228, %v304, 0
    %v313 = vsel %vm228, %v306, 0
    %315 = vmatpush.xpose.msra.mxu0 0.0
    %316 = vmatpush.xpose.msra.mxu0 0.0
    %317 = vmatpush.xpose.msra.mxu0 0.0
    %318 = vmatpush.xpose.msra.mxu0 0.0
    %319 = vmatpush.xpose.msra.mxu0 0.0
    %320 = vmatpush.xpose.msra.mxu0 0.0
    %321 = vmatpush.xpose.msra.mxu0 0.0
    %322 = vmatpush.xpose.msra.mxu0 0.0
    %323 = vmatpush.xpose.msra.mxu0 0.0
    %324 = vmatpush.xpose.msra.mxu0 0.0
    %325 = vmatpush.xpose.msra.mxu0 0.0
    %326 = vmatpush.xpose.msra.mxu0 0.0
    %327 = vmatpush.xpose.msra.mxu0 0.0
    %328 = vmatpush.xpose.msra.mxu0 0.0
    %329 = vmatpush.xpose.msra.mxu0 %v313
    %330 = vmatpush.xpose.msra.mxu0 %v311
    %331 = vmatmul.f32.gmra.mxu0 %v307
    %v332 = vpop.f32.mrf.mxu0
    %v333 = vadd.f32 0.0, %v332
    %334 = vmatmul.f32.gmra.mxu0 %v309
    %v335 = vpop.f32.mrf.mxu0
    %v336 = vadd.f32 0.0, %v335
    %337 = vdwg.mxu0
    %338 = vrot.lane.b32.xlu0 %v69, 104
    %v339 = vpop.permute.xlu0 %338
    %340 = vrot.lane.b32.xlu0 %v72, 104
    %v341 = vpop.permute.xlu0 %340
    %342 = vrot.lane.b32.xlu0 %v69, 72
    %v343 = vpop.permute.xlu0 %342
    %344 = vrot.lane.b32.xlu0 %v72, 72
    %v345 = vpop.permute.xlu0 %344
    %v346 = vsel %vm228, %v339, 0
    %v348 = vsel %vm228, %v341, 0
    %v350 = vsel %vm228, %v343, 0
    %v352 = vsel %vm228, %v345, 0
    %354 = vmatpush.xpose.msra.mxu0 0.0
    %355 = vmatpush.xpose.msra.mxu0 0.0
    %356 = vmatpush.xpose.msra.mxu0 0.0
    %357 = vmatpush.xpose.msra.mxu0 0.0
    %358 = vmatpush.xpose.msra.mxu0 0.0
    %359 = vmatpush.xpose.msra.mxu0 0.0
    %360 = vmatpush.xpose.msra.mxu0 0.0
    %361 = vmatpush.xpose.msra.mxu0 0.0
    %362 = vmatpush.xpose.msra.mxu0 0.0
    %363 = vmatpush.xpose.msra.mxu0 0.0
    %364 = vmatpush.xpose.msra.mxu0 0.0
    %365 = vmatpush.xpose.msra.mxu0 0.0
    %366 = vmatpush.xpose.msra.mxu0 0.0
    %367 = vmatpush.xpose.msra.mxu0 0.0
    %368 = vmatpush.xpose.msra.mxu0 %v352
    %369 = vmatpush.xpose.msra.mxu0 %v350
    %370 = vmatmul.f32.gmra.mxu0 %v346
    %v371 = vpop.f32.mrf.mxu0
    %v372 = vadd.f32 0.0, %v371
    %373 = vmatmul.f32.gmra.mxu0 %v348
    %v374 = vpop.f32.mrf.mxu0
    %v375 = vadd.f32 0.0, %v374
    %376 = vdwg.mxu0
    %v377 = vadd.f32 %v255, %v214
    %v378 = vadd.f32 %v258, %v215
    %v379 = vadd.f32 %v294, %v216
    %v380 = vadd.f32 %v297, %v217
    %v381 = vadd.f32 %v333, %v218
    %v382 = vadd.f32 %v336, %v219
    %v383 = vadd.f32 %v372, %v220
    %v384 = vadd.f32 %v375, %v221
    %vm385 = vcmask 130048
    %v386 = vsel %vm385, %v377, -inf
    %387 = vmax.xlane.f32.xlu0 %v386
    %v388 = vpop.xlane.xlu0 %387
    %v389 = vsel %vm385, %v378, -inf
    %390 = vmax.xlane.f32.xlu0 %v389
    %v391 = vpop.xlane.xlu0 %390
    %v392 = vsel %vm385, %v379, -inf
    %393 = vmax.xlane.f32.xlu0 %v392
    %v394 = vpop.xlane.xlu0 %393
    %v395 = vsel %vm385, %v380, -inf
    %396 = vmax.xlane.f32.xlu0 %v395
    %v397 = vpop.xlane.xlu0 %396
    %v398 = vsel %vm385, %v381, -inf
    %399 = vmax.xlane.f32.xlu0 %v398
    %v400 = vpop.xlane.xlu0 %399
    %v401 = vsel %vm385, %v382, -inf
    %402 = vmax.xlane.f32.xlu0 %v401
    %v403 = vpop.xlane.xlu0 %402
    %v404 = vsel %vm385, %v383, -inf
    %405 = vmax.xlane.f32.xlu0 %v404
    %v406 = vpop.xlane.xlu0 %405
    %v407 = vsel %vm385, %v384, -inf
    %408 = vmax.xlane.f32.xlu0 %v407
    %v409 = vpop.xlane.xlu0 %408
    %v410 = vsub.f32 %v377, %v388
    %v411 = vsub.f32 %v378, %v391
    %v412 = vsub.f32 %v379, %v394
    %v413 = vsub.f32 %v380, %v397
    %v414 = vsub.f32 %v381, %v400
    %v415 = vsub.f32 %v382, %v403
    %v416 = vsub.f32 %v383, %v406
    %v417 = vsub.f32 %v384, %v409
    %v418 = vmul.f32 %v410, 1.442695
    %v419 = vpow.pop %v418
    %v420 = vmul.f32 %v411, 1.442695
    %v421 = vpow.pop %v420
    %v422 = vmul.f32 %v412, 1.442695
    %v423 = vpow.pop %v422
    %v424 = vmul.f32 %v413, 1.442695
    %v425 = vpow.pop %v424
    %v426 = vmul.f32 %v414, 1.442695
    %v427 = vpow.pop %v426
    %v428 = vmul.f32 %v415, 1.442695
    %v429 = vpow.pop %v428
    %v430 = vmul.f32 %v416, 1.442695
    %v431 = vpow.pop %v430
    %v432 = vmul.f32 %v417, 1.442695
    %v433 = vpow.pop %v432
    %v434 = vsel %vm385, %v419, 0.0
    %435 = vadd.xlane.f32.xlu0 %v434
    %v436 = vpop.xlane.xlu0 %435
    %v437 = vsel %vm385, %v421, 0.0
    %438 = vadd.xlane.f32.xlu0 %v437
    %v439 = vpop.xlane.xlu0 %438
    %v440 = vsel %vm385, %v423, 0.0
    %441 = vadd.xlane.f32.xlu0 %v440
    %v442 = vpop.xlane.xlu0 %441
    %v443 = vsel %vm385, %v425, 0.0
    %444 = vadd.xlane.f32.xlu0 %v443
    %v445 = vpop.xlane.xlu0 %444
    %v446 = vsel %vm385, %v427, 0.0
    %447 = vadd.xlane.f32.xlu0 %v446
    %v448 = vpop.xlane.xlu0 %447
    %v449 = vsel %vm385, %v429, 0.0
    %450 = vadd.xlane.f32.xlu0 %v449
    %v451 = vpop.xlane.xlu0 %450
    %v452 = vsel %vm385, %v431, 0.0
    %453 = vadd.xlane.f32.xlu0 %v452
    %v454 = vpop.xlane.xlu0 %453
    %v455 = vsel %vm385, %v433, 0.0
    %456 = vadd.xlane.f32.xlu0 %v455
    %v457 = vpop.xlane.xlu0 %456
    %v458 = vrcp.pop %v436
    %v459 = vrcp.pop %v439
    %v460 = vrcp.pop %v442
    %v461 = vrcp.pop %v445
    %v462 = vrcp.pop %v448
    %v463 = vrcp.pop %v451
    %v464 = vrcp.pop %v454
    %v465 = vrcp.pop %v457
    %v466 = vmul.f32 %v419, %v458
    %v467 = vmul.f32 %v421, %v459
    %v468 = vmul.f32 %v423, %v460
    %v469 = vmul.f32 %v425, %v461
    %v470 = vmul.f32 %v427, %v462
    %v471 = vmul.f32 %v429, %v463
    %v472 = vmul.f32 %v431, %v464
    %v473 = vmul.f32 %v433, %v465
    %474 = vrot.lane.b32.xlu0 %v69, 64
    %v475 = vpop.permute.xlu0 %474
    %476 = vrot.lane.b32.xlu0 %v72, 64
    %v477 = vpop.permute.xlu0 %476
    %v481 = vsel %vm385, %v466, 0
    %v484 = vsel %vm385, %v467, 0
    %486 = vmatpush.msra.mxu0 0.0
    %487 = vmatpush.msra.mxu0 0.0
    %488 = vmatpush.msra.mxu0 0.0
    %489 = vmatpush.msra.mxu0 0.0
    %490 = vmatpush.msra.mxu0 0.0
    %491 = vmatpush.msra.mxu0 0.0
    %492 = vmatpush.msra.mxu0 0.0
    %493 = vmatpush.msra.mxu0 0.0
    %494 = vmatpush.msra.mxu0 0.0
    %495 = vmatpush.msra.mxu0 0.0
    %496 = vmatpush.msra.mxu0 0.0
    %497 = vmatpush.msra.mxu0 0.0
    %498 = vmatpush.msra.mxu0 0.0
    %499 = vmatpush.msra.mxu0 0.0
    %500 = vmatpush.msra.mxu0 %v477
    %501 = vmatpush.msra.mxu0 %v475
    %502 = vmatmul.f32.gmra.mxu0 %v481
    %v503 = vpop.f32.mrf.mxu0
    %v504 = vadd.f32 0.0, %v503
    %505 = vmatmul.f32.gmra.mxu0 %v484
    %v506 = vpop.f32.mrf.mxu0
    %v507 = vadd.f32 0.0, %v506
    %508 = vdwg.mxu0
    %v509 = vld [vmem:[#allocation2] sm:$0xff]
    %511 = vrot.lane.b32.xlu0 %v509, 32
    %v512 = vpop.permute.xlu0 %511
    %v515 = vsel %vm228, %v504, 0
    %v518 = vsel %vm228, %v507, 0
    %520 = vmatpush.msra.mxu0 0.0
    %521 = vmatpush.msra.mxu0 0.0
    %522 = vmatpush.msra.mxu0 0.0
    %523 = vmatpush.msra.mxu0 0.0
    %524 = vmatpush.msra.mxu0 0.0
    %525 = vmatpush.msra.mxu0 0.0
    %526 = vmatpush.msra.mxu0 0.0
    %527 = vmatpush.msra.mxu0 0.0
    %528 = vmatpush.msra.mxu0 0.0
    %529 = vmatpush.msra.mxu0 0.0
    %530 = vmatpush.msra.mxu0 0.0
    %531 = vmatpush.msra.mxu0 0.0
    %532 = vmatpush.msra.mxu0 0.0
    %533 = vmatpush.msra.mxu0 0.0
    %534 = vmatpush.msra.mxu0 0.0
    %535 = vmatpush.msra.mxu0 %v512
    %536 = vmatmul.f32.gmra.mxu0 %v515
    %v537 = vpop.f32.mrf.mxu0
    %v538 = vadd.f32 0.0, %v537
    %539 = vmatmul.f32.gmra.mxu0 %v518
    %v540 = vpop.f32.mrf.mxu0
    %v541 = vadd.f32 0.0, %v540
    %542 = vdwg.mxu0
    %545 = vrot.lane.b32.xlu0 %v538, 96
    %v546 = vpop.permute.xlu0 %545
    %547 = vrot.lane.b32.xlu0 %v541, 96
    %v548 = vpop.permute.xlu0 %547
    %v551 = vadd.f32 %v42, %v546
    %v552 = vadd.f32 %v42, %v548
    %553 = vrot.lane.b32.xlu0 %v69, 56
    %v554 = vpop.permute.xlu0 %553
    %555 = vrot.lane.b32.xlu0 %v72, 56
    %v556 = vpop.permute.xlu0 %555
    %v560 = vsel %vm385, %v468, 0
    %v563 = vsel %vm385, %v469, 0
    %565 = vmatpush.msra.mxu0 0.0
    %566 = vmatpush.msra.mxu0 0.0
    %567 = vmatpush.msra.mxu0 0.0
    %568 = vmatpush.msra.mxu0 0.0
    %569 = vmatpush.msra.mxu0 0.0
    %570 = vmatpush.msra.mxu0 0.0
    %571 = vmatpush.msra.mxu0 0.0
    %572 = vmatpush.msra.mxu0 0.0
    %573 = vmatpush.msra.mxu0 0.0
    %574 = vmatpush.msra.mxu0 0.0
    %575 = vmatpush.msra.mxu0 0.0
    %576 = vmatpush.msra.mxu0 0.0
    %577 = vmatpush.msra.mxu0 0.0
    %578 = vmatpush.msra.mxu0 0.0
    %579 = vmatpush.msra.mxu0 %v556
    %580 = vmatpush.msra.mxu0 %v554
    %581 = vmatmul.f32.gmra.mxu0 %v560
    %v582 = vpop.f32.mrf.mxu0
    %v583 = vadd.f32 0.0, %v582
    %584 = vmatmul.f32.gmra.mxu0 %v563
    %v585 = vpop.f32.mrf.mxu0
    %v586 = vadd.f32 0.0, %v585
    %587 = vdwg.mxu0
    %v588 = vld [vmem:[#allocation2 + $0x10] sm:$0xff]
    %590 = vrot.lane.b32.xlu0 %v588, 32
    %v591 = vpop.permute.xlu0 %590
    %v594 = vsel %vm228, %v583, 0
    %v597 = vsel %vm228, %v586, 0
    %599 = vmatpush.msra.mxu0 0.0
    %600 = vmatpush.msra.mxu0 0.0
    %601 = vmatpush.msra.mxu0 0.0
    %602 = vmatpush.msra.mxu0 0.0
    %603 = vmatpush.msra.mxu0 0.0
    %604 = vmatpush.msra.mxu0 0.0
    %605 = vmatpush.msra.mxu0 0.0
    %606 = vmatpush.msra.mxu0 0.0
    %607 = vmatpush.msra.mxu0 0.0
    %608 = vmatpush.msra.mxu0 0.0
    %609 = vmatpush.msra.mxu0 0.0
    %610 = vmatpush.msra.mxu0 0.0
    %611 = vmatpush.msra.mxu0 0.0
    %612 = vmatpush.msra.mxu0 0.0
    %613 = vmatpush.msra.mxu0 0.0
    %614 = vmatpush.msra.mxu0 %v591
    %615 = vmatmul.f32.gmra.mxu0 %v594
    %v616 = vpop.f32.mrf.mxu0
    %v617 = vadd.f32 0.0, %v616
    %618 = vmatmul.f32.gmra.mxu0 %v597
    %v619 = vpop.f32.mrf.mxu0
    %v620 = vadd.f32 0.0, %v619
    %621 = vdwg.mxu0
    %624 = vrot.lane.b32.xlu0 %v617, 96
    %v625 = vpop.permute.xlu0 %624
    %626 = vrot.lane.b32.xlu0 %v620, 96
    %v627 = vpop.permute.xlu0 %626
    %v630 = vadd.f32 %v551, %v625
    %v631 = vadd.f32 %v552, %v627
    %632 = vrot.lane.b32.xlu0 %v69, 48
    %v633 = vpop.permute.xlu0 %632
    %634 = vrot.lane.b32.xlu0 %v72, 48
    %v635 = vpop.permute.xlu0 %634
    %v639 = vsel %vm385, %v470, 0
    %v642 = vsel %vm385, %v471, 0
    %644 = vmatpush.msra.mxu0 0.0
    %645 = vmatpush.msra.mxu0 0.0
    %646 = vmatpush.msra.mxu0 0.0
    %647 = vmatpush.msra.mxu0 0.0
    %648 = vmatpush.msra.mxu0 0.0
    %649 = vmatpush.msra.mxu0 0.0
    %650 = vmatpush.msra.mxu0 0.0
    %651 = vmatpush.msra.mxu0 0.0
    %652 = vmatpush.msra.mxu0 0.0
    %653 = vmatpush.msra.mxu0 0.0
    %654 = vmatpush.msra.mxu0 0.0
    %655 = vmatpush.msra.mxu0 0.0
    %656 = vmatpush.msra.mxu0 0.0
    %657 = vmatpush.msra.mxu0 0.0
    %658 = vmatpush.msra.mxu0 %v635
    %659 = vmatpush.msra.mxu0 %v633
    %660 = vmatmul.f32.gmra.mxu0 %v639
    %v661 = vpop.f32.mrf.mxu0
    %v662 = vadd.f32 0.0, %v661
    %663 = vmatmul.f32.gmra.mxu0 %v642
    %v664 = vpop.f32.mrf.mxu0
    %v665 = vadd.f32 0.0, %v664
    %666 = vdwg.mxu0
    %v667 = vld [vmem:[#allocation2 + $0x20] sm:$0xff]
    %669 = vrot.lane.b32.xlu0 %v667, 32
    %v670 = vpop.permute.xlu0 %669
    %v673 = vsel %vm228, %v662, 0
    %v676 = vsel %vm228, %v665, 0
    %678 = vmatpush.msra.mxu0 0.0
    %679 = vmatpush.msra.mxu0 0.0
    %680 = vmatpush.msra.mxu0 0.0
    %681 = vmatpush.msra.mxu0 0.0
    %682 = vmatpush.msra.mxu0 0.0
    %683 = vmatpush.msra.mxu0 0.0
    %684 = vmatpush.msra.mxu0 0.0
    %685 = vmatpush.msra.mxu0 0.0
    %686 = vmatpush.msra.mxu0 0.0
    %687 = vmatpush.msra.mxu0 0.0
    %688 = vmatpush.msra.mxu0 0.0
    %689 = vmatpush.msra.mxu0 0.0
    %690 = vmatpush.msra.mxu0 0.0
    %691 = vmatpush.msra.mxu0 0.0
    %692 = vmatpush.msra.mxu0 0.0
    %693 = vmatpush.msra.mxu0 %v670
    %694 = vmatmul.f32.gmra.mxu0 %v673
    %v695 = vpop.f32.mrf.mxu0
    %v696 = vadd.f32 0.0, %v695
    %697 = vmatmul.f32.gmra.mxu0 %v676
    %v698 = vpop.f32.mrf.mxu0
    %v699 = vadd.f32 0.0, %v698
    %700 = vdwg.mxu0
    %703 = vrot.lane.b32.xlu0 %v696, 96
    %v704 = vpop.permute.xlu0 %703
    %705 = vrot.lane.b32.xlu0 %v699, 96
    %v706 = vpop.permute.xlu0 %705
    %v709 = vadd.f32 %v630, %v704
    %v710 = vadd.f32 %v631, %v706
    %711 = vrot.lane.b32.xlu0 %v69, 40
    %v712 = vpop.permute.xlu0 %711
    %713 = vrot.lane.b32.xlu0 %v72, 40
    %v714 = vpop.permute.xlu0 %713
    %v718 = vsel %vm385, %v472, 0
    %v721 = vsel %vm385, %v473, 0
    %723 = vmatpush.msra.mxu0 0.0
    %724 = vmatpush.msra.mxu0 0.0
    %725 = vmatpush.msra.mxu0 0.0
    %726 = vmatpush.msra.mxu0 0.0
    %727 = vmatpush.msra.mxu0 0.0
    %728 = vmatpush.msra.mxu0 0.0
    %729 = vmatpush.msra.mxu0 0.0
    %730 = vmatpush.msra.mxu0 0.0
    %731 = vmatpush.msra.mxu0 0.0
    %732 = vmatpush.msra.mxu0 0.0
    %733 = vmatpush.msra.mxu0 0.0
    %734 = vmatpush.msra.mxu0 0.0
    %735 = vmatpush.msra.mxu0 0.0
    %736 = vmatpush.msra.mxu0 0.0
    %737 = vmatpush.msra.mxu0 %v714
    %738 = vmatpush.msra.mxu0 %v712
    %739 = vmatmul.f32.gmra.mxu0 %v718
    %v740 = vpop.f32.mrf.mxu0
    %v741 = vadd.f32 0.0, %v740
    %742 = vmatmul.f32.gmra.mxu0 %v721
    %v743 = vpop.f32.mrf.mxu0
    %v744 = vadd.f32 0.0, %v743
    %745 = vdwg.mxu0
    %747 = vrot.lane.b32.xlu0 %v39, 32
    %v748 = vpop.permute.xlu0 %747
    %v751 = vsel %vm228, %v741, 0
    %v754 = vsel %vm228, %v744, 0
    %756 = vmatpush.msra.mxu0 0.0
    %757 = vmatpush.msra.mxu0 0.0
    %758 = vmatpush.msra.mxu0 0.0
    %759 = vmatpush.msra.mxu0 0.0
    %760 = vmatpush.msra.mxu0 0.0
    %761 = vmatpush.msra.mxu0 0.0
    %762 = vmatpush.msra.mxu0 0.0
    %763 = vmatpush.msra.mxu0 0.0
    %764 = vmatpush.msra.mxu0 0.0
    %765 = vmatpush.msra.mxu0 0.0
    %766 = vmatpush.msra.mxu0 0.0
    %767 = vmatpush.msra.mxu0 0.0
    %768 = vmatpush.msra.mxu0 0.0
    %769 = vmatpush.msra.mxu0 0.0
    %770 = vmatpush.msra.mxu0 0.0
    %771 = vmatpush.msra.mxu0 %v748
    %772 = vmatmul.f32.gmra.mxu0 %v751
    %v773 = vpop.f32.mrf.mxu0
    %v774 = vadd.f32 0.0, %v773
    %775 = vmatmul.f32.gmra.mxu0 %v754
    %v776 = vpop.f32.mrf.mxu0
    %v777 = vadd.f32 0.0, %v776
    %778 = vdwg.mxu0
    %781 = vrot.lane.b32.xlu0 %v774, 96
    %v782 = vpop.permute.xlu0 %781
    %783 = vrot.lane.b32.xlu0 %v777, 96
    %v784 = vpop.permute.xlu0 %783
    %v787 = vadd.f32 %v709, %v782
    %v788 = vadd.f32 %v710, %v784
    %791 = vrot.lane.b32.xlu0 %v787, 32
    %v792 = vpop.permute.xlu0 %791
    %793 = vrot.lane.b32.xlu0 %v788, 32
    %v794 = vpop.permute.xlu0 %793
    %v797 = vadd.f32 %v34, %v792
    %v798 = vadd.f32 %v35, %v794
    %v799 = vsel %vm44, %v797, 0.0
    %800 = vadd.xlane.f32.xlu0 %v799
    %v801 = vpop.xlane.xlu0 %800
    %v802 = vsel %vm44, %v798, 0.0
    %803 = vadd.xlane.f32.xlu0 %v802
    %v804 = vpop.xlane.xlu0 %803
    %v805 = vrcp.pop 32.0
    %v806 = vmul.f32 32.0, %v805
    %v807 = vsub.f32 1.0, %v806
    %v808 = vmul.f32 %v805, %v807
    %v809 = vadd.f32 %v805, %v808
    %vm810 = vweird.f32 %v805
    %v811 = vsel %vm810, %v805, %v809
    %v812 = vmul.f32 %v801, %v811
    %v813 = vmul.f32 %v804, %v811
    %v814 = vsub.f32 %v797, %v812
    %v815 = vsub.f32 %v798, %v813
    %v816 = vmul.f32 %v814, %v814
    %v817 = vmul.f32 %v815, %v815
    %v818 = vsel %vm44, %v816, 0.0
    %819 = vadd.xlane.f32.xlu0 %v818
    %v820 = vpop.xlane.xlu0 %819
    %v821 = vsel %vm44, %v817, 0.0
    %822 = vadd.xlane.f32.xlu0 %v821
    %v823 = vpop.xlane.xlu0 %822
    %v824 = vmul.f32 %v820, %v811
    %v825 = vmul.f32 %v823, %v811
    %v826 = vadd.f32 %v824, 1e-05
    %v827 = vadd.f32 %v825, 1e-05
    %v828 = vrsqrt.pop %v826
    %v829 = vmul.f32 %v828, %v826
    %v830 = vmul.f32 %v829, %v828
    %v831 = vmul.f32 0.5, %v830
    %v832 = vsub.f32 1.5, %v831
    %v833 = vmul.f32 %v828, %v832
    %vm834 = vweird.f32 %v826
    %vm835 = vweird.f32 %v828
    %vm836 = vmor %vm834, %vm835
    %v837 = vsel %vm836, %v828, %v833
    %v838 = vrsqrt.pop %v827
    %v839 = vmul.f32 %v838, %v827
    %v840 = vmul.f32 %v839, %v838
    %v841 = vmul.f32 0.5, %v840
    %v842 = vsub.f32 1.5, %v841
    %v843 = vmul.f32 %v838, %v842
    %vm844 = vweird.f32 %v827
    %vm845 = vweird.f32 %v838
    %vm846 = vmor %vm844, %vm845
    %v847 = vsel %vm846, %v838, %v843
    %v848 = vmul.f32 %v814, %v837
    %v849 = vmul.f32 %v815, %v847
    %v850 = vld [vmem:[%s3 + $0x1] sm:$0x1]
    %v852 = vperm.slane %v850, 0
    %853 = vrot.lane.b32.xlu0 %v852, 32
    %v854 = vpop.permute.xlu0 %853
    %v856 = vmul.f32 %v848, %v854
    %v857 = vmul.f32 %v849, %v854
    %v858 = vld [vmem:[%s3 + $0x2] sm:$0x1]
    %v860 = vperm.slane %v858, 0
    %v862 = vadd.f32 %v856, %v860
    %v863 = vadd.f32 %v857, %v860
    %v864 = vld [vmem:[#allocation2 + $0x8] sm:$0xff]
    %v865 = vld [vmem:[#allocation2 + $0x18] sm:$0xff]
    %v866 = vld [vmem:[#allocation2 + $0x28] sm:$0xff]
    %v867 = vld [vmem:[#allocation2 + $0x38] sm:$0xff]
    %v870 = vsel %vm44, %v862, 0
    %v873 = vsel %vm44, %v863, 0
    %875 = vmatpush.msra.mxu0 0.0
    %876 = vmatpush.msra.mxu0 0.0
    %877 = vmatpush.msra.mxu0 0.0
    %878 = vmatpush.msra.mxu0 0.0
    %879 = vmatpush.msra.mxu0 0.0
    %880 = vmatpush.msra.mxu0 0.0
    %881 = vmatpush.msra.mxu0 0.0
    %882 = vmatpush.msra.mxu0 0.0
    %883 = vmatpush.msra.mxu0 0.0
    %884 = vmatpush.msra.mxu0 0.0
    %885 = vmatpush.msra.mxu0 0.0
    %886 = vmatpush.msra.mxu0 0.0
    %887 = vmatpush.msra.mxu0 %v867
    %888 = vmatpush.msra.mxu0 %v866
    %889 = vmatpush.msra.mxu0 %v865
    %890 = vmatpush.msra.mxu0 %v864
    %891 = vmatmul.f32.gmra.mxu0 %v870
    %v892 = vpop.f32.mrf.mxu0
    %v893 = vadd.f32 %v852, %v892
    %894 = vmatmul.f32.gmra.mxu0 %v873
    %v895 = vpop.f32.mrf.mxu0
    %v896 = vadd.f32 %v852, %v895
    %897 = vdwg.mxu0
    %v898 = vmax.f32 %v893, 0.0
    %v899 = vmax.f32 %v896, 0.0
    %904 = vrot.lane.b32.xlu0 %v864, 64
    %v905 = vpop.permute.xlu0 %904
    %906 = vrot.lane.b32.xlu0 %v865, 64
    %v907 = vpop.permute.xlu0 %906
    %908 = vrot.lane.b32.xlu0 %v866, 64
    %v909 = vpop.permute.xlu0 %908
    %910 = vrot.lane.b32.xlu0 %v867, 64
    %v911 = vpop.permute.xlu0 %910
    %912 = vrot.lane.b32.xlu0 %v852, 64
    %v913 = vpop.permute.xlu0 %912
    %vm915 = vcmask 523264
    %v917 = vsel %vm915, %v898, 0
    %v920 = vsel %vm915, %v899, 0
    %v922 = vsel %vm915, %v905, 0
    %v924 = vsel %vm915, %v907, 0
    %v926 = vsel %vm915, %v909, 0
    %v928 = vsel %vm915, %v911, 0
    %930 = vmatpush.xpose.msra.mxu0 0.0
    %931 = vmatpush.xpose.msra.mxu0 0.0
    %932 = vmatpush.xpose.msra.mxu0 0.0
    %933 = vmatpush.xpose.msra.mxu0 0.0
    %934 = vmatpush.xpose.msra.mxu0 0.0
    %935 = vmatpush.xpose.msra.mxu0 0.0
    %936 = vmatpush.xpose.msra.mxu0 0.0
    %937 = vmatpush.xpose.msra.mxu0 0.0
    %938 = vmatpush.xpose.msra.mxu0 0.0
    %939 = vmatpush.xpose.msra.mxu0 0.0
    %940 = vmatpush.xpose.msra.mxu0 0.0
    %941 = vmatpush.xpose.msra.mxu0 0.0
    %942 = vmatpush.xpose.msra.mxu0 %v928
    %943 = vmatpush.xpose.msra.mxu0 %v926
    %944 = vmatpush.xpose.msra.mxu0 %v924
    %945 = vmatpush.xpose.msra.mxu0 %v922
    %946 = vmatmul.f32.gmra.mxu0 %v917
    %v947 = vpop.f32.mrf.mxu0
    %v948 = vadd.f32 %v913, %v947
    %949 = vmatmul.f32.gmra.mxu0 %v920
    %v950 = vpop.f32.mrf.mxu0
    %v951 = vadd.f32 %v913, %v950
    %952 = vdwg.mxu0
    %v953 = vadd.f32 %v862, %v948
    %v954 = vadd.f32 %v863, %v951
    %v955 = vsel %vm44, %v953, 0.0
    %956 = vadd.xlane.f32.xlu0 %v955
    %v957 = vpop.xlane.xlu0 %956
    %v958 = vsel %vm44, %v954, 0.0
    %959 = vadd.xlane.f32.xlu0 %v958
    %v960 = vpop.xlane.xlu0 %959
    %v961 = vmul.f32 %v957, %v811
    %v962 = vmul.f32 %v960, %v811
    %v963 = vsub.f32 %v953, %v961
    %v964 = vsub.f32 %v954, %v962
    %v965 = vmul.f32 %v963, %v963
    %v966 = vmul.f32 %v964, %v964
    %v967 = vsel %vm44, %v965, 0.0
    %968 = vadd.xlane.f32.xlu0 %v967
    %v969 = vpop.xlane.xlu0 %968
    %v970 = vsel %vm44, %v966, 0.0
    %971 = vadd.xlane.f32.xlu0 %v970
    %v972 = vpop.xlane.xlu0 %971
    %v973 = vmul.f32 %v969, %v811
    %v974 = vmul.f32 %v972, %v811
    %v975 = vadd.f32 %v973, 1e-05
    %v976 = vadd.f32 %v974, 1e-05
    %v977 = vrsqrt.pop %v975
    %v978 = vmul.f32 %v977, %v975
    %v979 = vmul.f32 %v978, %v977
    %v980 = vmul.f32 0.5, %v979
    %v981 = vsub.f32 1.5, %v980
    %v982 = vmul.f32 %v977, %v981
    %vm983 = vweird.f32 %v975
    %vm984 = vweird.f32 %v977
    %vm985 = vmor %vm983, %vm984
    %v986 = vsel %vm985, %v977, %v982
    %v987 = vrsqrt.pop %v976
    %v988 = vmul.f32 %v987, %v976
    %v989 = vmul.f32 %v988, %v987
    %v990 = vmul.f32 0.5, %v989
    %v991 = vsub.f32 1.5, %v990
    %v992 = vmul.f32 %v987, %v991
    %vm993 = vweird.f32 %v976
    %vm994 = vweird.f32 %v987
    %vm995 = vmor %vm993, %vm994
    %v996 = vsel %vm995, %v987, %v992
    %v997 = vmul.f32 %v963, %v986
    %v998 = vmul.f32 %v964, %v996
    %999 = vrot.lane.b32.xlu0 %v860, 96
    %v1000 = vpop.permute.xlu0 %999
    %v1002 = vmul.f32 %v997, %v1000
    %v1003 = vmul.f32 %v998, %v1000
    %1004 = vrot.lane.b32.xlu0 %v860, 64
    %v1005 = vpop.permute.xlu0 %1004
    %v1007 = vadd.f32 %v1002, %v1005
    %v1008 = vadd.f32 %v1003, %v1005
    %1009 = vst.msk [vmem:[#allocation5] sm:$0xff] %vm44, %v1007
    %1010 = vst.msk [vmem:[#allocation5 + $0x8] sm:$0xff] %vm44, %v1008
    // Predicated region
    $region22: #{srp_encoder_layer.1} parent=1 // pred_check
      _
    $region23: #{srp_encoder_layer.1} parent=1 // pred_check_branch
      %1012 = sbr.rel (0) target = $region25
    $region24: #{srp_encoder_layer.1} parent=1 // pred_region
      %1014 = vsyncadd [#allocation4], 0
      %s1015 = sshll.u32 [#allocation5], 4
      %s1016 = int_to_ptr.vmem [resolvable:$true] %s1015
      %s1017 = sshll.u32 %s4, 4
      %s1018 = int_to_ptr.hbm [resolvable:$true] %s1017
      %1023 = dma.vmem_to_hbm [thread:$0]  %s1016, 256, %s1018, [#allocation4], 128, 128, 8
    $region25: #{srp_encoder_layer.1} parent=1 // pred_fallthru
      _
    // Predicated region
    $region26: #{srp_encoder_layer.1} parent=1 // pred_check
      _
    $region27: #{srp_encoder_layer.1} parent=1 // pred_check_branch
      %1025 = sbr.rel (0) target = $region29
    $region28: #{srp_encoder_layer.1} parent=1 // pred_region
      %1027 = dma.done [#allocation4], 256
    $region29: #{srp_encoder_layer.1} parent=1 // pred_fallthru
      _
    %1028 = vsyncpa [#allocation3], 1
    %1029 = vsyncpa [#allocation4], 1

</llo_original>
